<compile_context>
chip_gen: v7x
topology: tpu7x:2x2x1
jax: 0.10.0
libtpu: 0.0.40
codegen_flags: <defaults>
</compile_context>

<pallas_src>
import functools

import jax
import jax.numpy as jnp
from jax.experimental import pallas as pl
from jax.experimental.pallas import tpu as pltpu

BN_EPS = 1e-5


def _round_up(x, m):
    return ((x + m - 1) // m) * m


def _pad2(x, rows, cols):
    r, c = x.shape
    if r == rows and c == cols:
        return x
    return jnp.pad(x, ((0, rows - r), (0, cols - c)))


# ----------------------------------------------------------------------------
# Fused GEMM + BN(scale,shift) [+ residual] + ReLU Pallas kernels
# ----------------------------------------------------------------------------
def _mm_bn_kernel(a_ref, w_ref, scale_ref, shift_ref, o_ref, acc_ref,
                  *, apply_relu):
    k = pl.program_id(2)

    @pl.when(k == 0)
    def _():
        acc_ref[...] = jnp.zeros_like(acc_ref)

    acc_ref[...] += jnp.dot(a_ref[...], w_ref[...],
                            preferred_element_type=jnp.float32)

    @pl.when(k == pl.num_programs(2) - 1)
    def _():
        out = acc_ref[...] * scale_ref[...] + shift_ref[...]
        if apply_relu:
            out = jnp.maximum(out, 0.0)
        o_ref[...] = out.astype(o_ref.dtype)


def _mm_bn_res_kernel(a_ref, w_ref, scale_ref, shift_ref, res_ref, o_ref,
                      acc_ref, *, apply_relu):
    k = pl.program_id(2)

    @pl.when(k == 0)
    def _():
        acc_ref[...] = jnp.zeros_like(acc_ref)

    acc_ref[...] += jnp.dot(a_ref[...], w_ref[...],
                            preferred_element_type=jnp.float32)

    @pl.when(k == pl.num_programs(2) - 1)
    def _():
        out = (acc_ref[...] * scale_ref[...] + shift_ref[...]
               + res_ref[...].astype(jnp.float32))
        if apply_relu:
            out = jnp.maximum(out, 0.0)
        o_ref[...] = out.astype(o_ref.dtype)


def matmul_bn_act(a, w, scale, shift, residual=None, apply_relu=True,
                  out_dtype=jnp.bfloat16):
    """out = maybe_relu((a @ w) * scale + shift [+ residual])."""
    M, K = a.shape
    K2, N = w.shape
    assert K == K2

    # --- per-problem tile sizes ------------------------------------------
    TM = min(_round_up(M, 8), 256)
    TN = min(_round_up(N, 128), 256)
    # Expose >= 2 parallel blocks when possible (megacore / v7x two-TC).
    if _round_up(M, TM) // TM == 1 and _round_up(N, TN) // TN == 1:
        if TN > 128:
            TN = 128
        elif TM >= 16:
            TM = _round_up(TM // 2, 8)
    # Small K: one full-K block (no 128-padding along K, no extra k steps).
    if K <= 2304:
        TK = _round_up(K, 8)
    else:
        TK = 512

    Mp = _round_up(M, TM)
    Np = _round_up(N, TN)
    Kp = _round_up(K, TK)

    ap = _pad2(a.astype(jnp.bfloat16), Mp, Kp)
    wp = _pad2(w.astype(jnp.bfloat16), Kp, Np)
    sp = _pad2(scale.reshape(1, -1).astype(jnp.float32), 1, Np)
    hp = _pad2(shift.reshape(1, -1).astype(jnp.float32), 1, Np)

    in_specs = [
        pl.BlockSpec((TM, TK), lambda i, j, k: (i, k)),
        pl.BlockSpec((TK, TN), lambda i, j, k: (k, j)),
        pl.BlockSpec((1, TN), lambda i, j, k: (0, j)),
        pl.BlockSpec((1, TN), lambda i, j, k: (0, j)),
    ]
    operands = [ap, wp, sp, hp]
    if residual is not None:
        rp = _pad2(residual.astype(jnp.bfloat16), Mp, Np)
        in_specs.append(pl.BlockSpec((TM, TN), lambda i, j, k: (i, j)))
        operands.append(rp)
        kernel = functools.partial(_mm_bn_res_kernel, apply_relu=apply_relu)
    else:
        kernel = functools.partial(_mm_bn_kernel, apply_relu=apply_relu)

    grid = (Mp // TM, Np // TN, Kp // TK)
    out = pl.pallas_call(
        kernel,
        out_shape=jax.ShapeDtypeStruct((Mp, Np), out_dtype),
        grid_spec=pltpu.PrefetchScalarGridSpec(
            num_scalar_prefetch=0,
            grid=grid,
            in_specs=in_specs,
            out_specs=pl.BlockSpec((TM, TN), lambda i, j, k: (i, j)),
            scratch_shapes=[pltpu.VMEM((TM, TN), jnp.float32)],
        ),
        compiler_params=pltpu.CompilerParams(
            dimension_semantics=("parallel", "parallel", "arbitrary")),
    )(*operands)
    return out[:M, :N]


# ----------------------------------------------------------------------------
# Fused adaptive avg-pool (1,1) + fully-connected head (single tiny kernel)
# ----------------------------------------------------------------------------
def _pool_fc_kernel(x_ref, w_ref, b_ref, logits_ref, f2_ref):
    pooled = jnp.mean(x_ref[...].astype(jnp.float32), axis=1)   # (N, C)
    f2_ref[...] = pooled
    logits_ref[...] = (jnp.dot(pooled, w_ref[...],
                               preferred_element_type=jnp.float32)
                       + b_ref[...])


def pool_fc(x_nhwc, w_fc, b_fc):
    n, h, w, c = x_nhwc.shape
    num_classes = w_fc.shape[0]
    xr = x_nhwc.reshape(n, h * w, c)
    wmat = jnp.transpose(w_fc).astype(jnp.float32)          # (C, num_classes)
    bias = b_fc.reshape(1, -1).astype(jnp.float32)
    logits, f2 = pl.pallas_call(
        _pool_fc_kernel,
        out_shape=(jax.ShapeDtypeStruct((n, num_classes), jnp.float32),
                   jax.ShapeDtypeStruct((n, c), jnp.float32)),
    )(xr, wmat, bias)
    return logits, f2


# ----------------------------------------------------------------------------
# Glue: im2col patch extraction (plain JAX, bf16)
# ----------------------------------------------------------------------------
def im2col(x, kh, kw, stride, pad):
    n, h, w, c = x.shape
    xp = jnp.pad(x, ((0, 0), (pad, pad), (pad, pad), (0, 0)))
    ho = (h + 2 * pad - kh) // stride + 1
    wo = (w + 2 * pad - kw) // stride + 1
    cols = []
    for i in range(kh):
        for j in range(kw):
            patch = jax.lax.slice(
                xp, (0, i, j, 0),
                (n, i + (ho - 1) * stride + 1, j + (wo - 1) * stride + 1, c),
                (1, stride, stride, 1))
            cols.append(patch)
    cols = jnp.concatenate(cols, axis=-1)          # (n, ho, wo, kh*kw*c)
    return cols.reshape(n * ho * wo, kh * kw * c), ho, wo


def conv_bn(x, convp, bnp, stride, relu, residual=None):
    """conv(kxk, pad=(k-1)//2) -> BN(folded) -> (+residual) -> (ReLU)."""
    cout, cin, kh, kw = convp["w"].shape
    pad = (kh - 1) // 2
    cols, ho, wo = im2col(x, kh, kw, stride, pad)
    wmat = jnp.transpose(convp["w"], (2, 3, 1, 0)).reshape(kh * kw * cin, cout)
    scale = bnp["gamma"] / jnp.sqrt(bnp["var"] + BN_EPS)
    shift = bnp["beta"] - bnp["mean"] * scale + scale * convp["b"]
    out = matmul_bn_act(cols, wmat, scale, shift, residual=residual,
                        apply_relu=relu, out_dtype=jnp.bfloat16)
    n = x.shape[0]
    return out.reshape(n, ho, wo, cout)


def resblock(x, p):
    s = p["s"]
    n = x.shape[0]
    out1 = conv_bn(x, p["conv1"], p["bn1"], stride=s, relu=True)
    if s == 2:
        iden = conv_bn(x, p["dconv"], p["dbn"], stride=2, relu=False)
    else:
        iden = x
    _, ho, wo, cout = out1.shape
    res_flat = iden.reshape(n * ho * wo, cout)
    # conv2 -> bn2 -> +identity -> relu, fused in the GEMM epilogue
    return conv_bn(out1, p["conv2"], p["bn2"], stride=1, relu=True,
                   residual=res_flat)


# ----------------------------------------------------------------------------
# Deterministic parameter initialization (matches module's __init__ shapes)
# ----------------------------------------------------------------------------
def init_params(key, num_classes=100):
    keys = iter(jax.random.split(key, 64))

    def conv(cin, cout, ksz):
        k1, k2 = jax.random.split(next(keys))
        fan_out = cout * ksz * ksz
        std = (2.0 / fan_out) ** 0.5            # kaiming_normal, fan_out, relu
        w = std * jax.random.normal(k1, (cout, cin, ksz, ksz), jnp.float32)
        fan_in = cin * ksz * ksz
        bound = 1.0 / (fan_in ** 0.5)
        b = jax.random.uniform(k2, (cout,), jnp.float32, -bound, bound)
        return {"w": w, "b": b}

    def bn(c, gamma=1.0):
        return {"gamma": jnp.full((c,), gamma, jnp.float32),
                "beta": jnp.zeros((c,), jnp.float32),
                "mean": jnp.zeros((c,), jnp.float32),
                "var": jnp.ones((c,), jnp.float32)}

    def block(cin, s):
        cout = cin * s
        p = {"s": s,
             "conv1": conv(cin, cout, 3), "bn1": bn(cout),
             "conv2": conv(cout, cout, 3),
             "bn2": bn(cout, gamma=0.0)}        # zero-init residual bn2.weight
        if s == 2:
            p["dconv"] = conv(cin, cout, 1)
            p["dbn"] = bn(cout)
        return p

    params = {
        "conv1": conv(3, 64, 3), "bn1": bn(64),
        "layer1": [block(64, 1), block(64, 1)],
        "layer2": [block(64, 2), block(128, 1)],
        "layer3": [block(128, 2), block(256, 1)],
        "layer4": [block(256, 2), block(512, 1)],
    }
    kfc1, kfc2 = jax.random.split(next(keys))
    bound = 1.0 / (512 ** 0.5)
    params["fc"] = {
        "w": jax.random.uniform(kfc1, (num_classes, 512), jnp.float32,
                                -bound, bound),
        "b": jax.random.uniform(kfc2, (num_classes,), jnp.float32,
                                -bound, bound),
    }
    return params


# ----------------------------------------------------------------------------
# Full forward pass: returns (logits, [f1 (NCHW), f2])
# ----------------------------------------------------------------------------
def resnet18_cifar_forward(params, x_nchw, feature=None):
    x = jnp.transpose(x_nchw, (0, 2, 3, 1)).astype(jnp.bfloat16)  # NCHW->NHWC
    x = conv_bn(x, params["conv1"], params["bn1"], stride=1, relu=True)
    for blk in params["layer1"]:
        x = resblock(x, blk)
    for blk in params["layer2"]:
        x = resblock(x, blk)
    for blk in params["layer3"]:
        x = resblock(x, blk)

    if feature is not None:                      # feature expected in NCHW
        f1_nchw = feature.astype(jnp.float32)
        x = jnp.transpose(feature, (0, 2, 3, 1)).astype(jnp.bfloat16)
    else:
        f1_nchw = jnp.transpose(x, (0, 3, 1, 2)).astype(jnp.float32)

    for blk in params["layer4"]:
        x = resblock(x, blk)

    logits, f2 = pool_fc(x, params["fc"]["w"], params["fc"]["b"])
    return logits, [f1_nchw, f2]


if __name__ == "__main__":
    key = jax.random.PRNGKey(0)
    pkey, xkey = jax.random.split(key)
    params = init_params(pkey, num_classes=100)

    # Small CIFAR-like input: batch=2, 3 channels, 16x16 spatial.
    x = jax.random.normal(xkey, (2, 3, 16, 16), jnp.float32)

    logits, feats = resnet18_cifar_forward(params, x)
    logits = jax.block_until_ready(logits)
    f1 = jax.block_until_ready(feats[0])
    f2 = jax.block_until_ready(feats[1])

    assert logits.shape == (2, 100), logits.shape
    assert f1.shape == (2, 256, 4, 4), f1.shape
    assert f2.shape == (2, 512), f2.shape
    assert bool(jnp.all(jnp.isfinite(logits)))
    print("KERNEL_OK")
</pallas_src>

<mosaic_0001>
module attributes {stable_mosaic.version = 11 : i64} {
  func.func @_mm_bn_kernel(%arg0: i32, %arg1: i32, %arg2: i32, %arg3: memref<256x32xbf16, #tpu.memory_space<vmem>>, %arg4: memref<32x128xbf16, #tpu.memory_space<vmem>>, %arg5: memref<1x128xf32, #tpu.memory_space<vmem>>, %arg6: memref<1x128xf32, #tpu.memory_space<vmem>>, %arg7: memref<256x128xbf16, #tpu.memory_space<vmem>>, %arg8: memref<256x128xf32, #tpu.memory_space<vmem>>) attributes {dimension_semantics = [#tpu.dimension_semantics<parallel>, #tpu.dimension_semantics<parallel>, #tpu.dimension_semantics<arbitrary>], iteration_bounds = array<i64: 2, 1, 1>, scalar_prefetch = 0 : i64, scratch_operands = 1 : i64, tpu.core_type = #tpu.core_type<tc>, window_params = [{transform_indices = @transform_0, window_bounds = array<i64: 256, 32>}, {transform_indices = @transform_1, window_bounds = array<i64: 32, 128>}, {transform_indices = @transform_2, window_bounds = array<i64: 1, 128>}, {transform_indices = @transform_3, window_bounds = array<i64: 1, 128>}, {transform_indices = @transform_4, window_bounds = array<i64: 256, 128>}]} {
    %c0_i32 = arith.constant 0 : i32
    %0 = arith.cmpi eq, %arg2, %c0_i32 : i32
    %1 = arith.extui %0 : i1 to i32
    %c0_i32_0 = arith.constant 0 : i32
    %2 = arith.cmpi ne, %1, %c0_i32_0 : i32
    scf.if %2 {
      %cst_10 = arith.constant 0.000000e+00 : f32
      %12 = vector.broadcast %cst_10 : f32 to vector<256x128xf32>
      %c0_11 = arith.constant 0 : index
      %c0_12 = arith.constant 0 : index
      %13 = vector.load %arg8[%c0_11, %c0_12] : memref<256x128xf32, #tpu.memory_space<vmem>>, vector<256x128xf32>
      tpu.vector_store %arg8[%c0_11, %c0_12], %12 {strides = array<i32>} : memref<256x128xf32, #tpu.memory_space<vmem>>, vector<256x128xf32>,
    } else {
    }
    %c0 = arith.constant 0 : index
    %c0_1 = arith.constant 0 : index
    %3 = vector.load %arg8[%c0, %c0_1] : memref<256x128xf32, #tpu.memory_space<vmem>>, vector<256x128xf32>
    %c0_2 = arith.constant 0 : index
    %c0_3 = arith.constant 0 : index
    %4 = vector.load %arg3[%c0_2, %c0_3] : memref<256x32xbf16, #tpu.memory_space<vmem>>, vector<256x32xbf16>
    %c0_4 = arith.constant 0 : index
    %c0_5 = arith.constant 0 : index
    %5 = vector.load %arg4[%c0_4, %c0_5] : memref<32x128xbf16, #tpu.memory_space<vmem>>, vector<32x128xbf16>
    %cst = arith.constant dense<0.000000e+00> : vector<256x128xf32>
    %6 = tpu.matmul %4, %5, %cst {dimension_numbers = #tpu.dot_dimension_numbers<[1], [0], [0], [1], [0, 0, 1, 1], [], []>} : vector<256x32xbf16>, vector<32x128xbf16>, vector<256x128xf32> -> vector<256x128xf32>
    %7 = arith.addf %3, %6 : vector<256x128xf32>
    %c0_6 = arith.constant 0 : index
    %c0_7 = arith.constant 0 : index
    %8 = vector.load %arg8[%c0_6, %c0_7] : memref<256x128xf32, #tpu.memory_space<vmem>>, vector<256x128xf32>
    tpu.vector_store %arg8[%c0_6, %c0_7], %7 {strides = array<i32>} : memref<256x128xf32, #tpu.memory_space<vmem>>, vector<256x128xf32>,
    %c0_i32_8 = arith.constant 0 : i32
    %9 = arith.cmpi eq, %arg2, %c0_i32_8 : i32
    %10 = arith.extui %9 : i1 to i32
    %c0_i32_9 = arith.constant 0 : i32
    %11 = arith.cmpi ne, %10, %c0_i32_9 : i32
    scf.if %11 {
      %c0_10 = arith.constant 0 : index
      %c0_11 = arith.constant 0 : index
      %12 = vector.load %arg8[%c0_10, %c0_11] : memref<256x128xf32, #tpu.memory_space<vmem>>, vector<256x128xf32>
      %c0_12 = arith.constant 0 : index
      %c0_13 = arith.constant 0 : index
      %13 = vector.load %arg5[%c0_12, %c0_13] : memref<1x128xf32, #tpu.memory_space<vmem>>, vector<1x128xf32>
      %14 = vector.broadcast %13 : vector<1x128xf32> to vector<256x128xf32>
      %15 = arith.mulf %12, %14 : vector<256x128xf32>
      %c0_14 = arith.constant 0 : index
      %c0_15 = arith.constant 0 : index
      %16 = vector.load %arg6[%c0_14, %c0_15] : memref<1x128xf32, #tpu.memory_space<vmem>>, vector<1x128xf32>
      %17 = vector.broadcast %16 : vector<1x128xf32> to vector<256x128xf32>
      %18 = arith.addf %15, %17 : vector<256x128xf32>
      %cst_16 = arith.constant 0.000000e+00 : f32
      %19 = vector.broadcast %cst_16 : f32 to vector<256x128xf32>
      %20 = arith.maximumf %18, %19 : vector<256x128xf32>
      %21 = arith.truncf %20 : vector<256x128xf32> to vector<256x128xbf16>
      %c0_17 = arith.constant 0 : index
      %c0_18 = arith.constant 0 : index
      %22 = vector.load %arg7[%c0_17, %c0_18] : memref<256x128xbf16, #tpu.memory_space<vmem>>, vector<256x128xbf16>
      tpu.vector_store %arg7[%c0_17, %c0_18], %21 {strides = array<i32>} : memref<256x128xbf16, #tpu.memory_space<vmem>>, vector<256x128xbf16>,
    } else {
    }
    return
  }
  func.func @transform_0(%arg0: i32, %arg1: i32, %arg2: i32) -> (i32, i32) {
    %c0_i32 = arith.constant 0 : i32
    return %arg0, %arg2 : i32, i32
  }
  func.func @transform_1(%arg0: i32, %arg1: i32, %arg2: i32) -> (i32, i32) {
    %c0_i32 = arith.constant 0 : i32
    return %arg2, %arg1 : i32, i32
  }
  func.func @transform_2(%arg0: i32, %arg1: i32, %arg2: i32) -> (i32, i32) {
    %c0_i32 = arith.constant 0 : i32
    %c0_i32_0 = arith.constant 0 : i32
    return %c0_i32, %arg1 : i32, i32
  }
  func.func @transform_3(%arg0: i32, %arg1: i32, %arg2: i32) -> (i32, i32) {
    %c0_i32 = arith.constant 0 : i32
    %c0_i32_0 = arith.constant 0 : i32
    return %c0_i32, %arg1 : i32, i32
  }
  func.func @transform_4(%arg0: i32, %arg1: i32, %arg2: i32) -> (i32, i32) {
    %c0_i32 = arith.constant 0 : i32
    return %arg0, %arg1 : i32, i32
  }
}

</mosaic_0001>

<llo_original>
// kernel: tpu_custom_call.1
$region0: #{tpu_custom_call.1}
  #allocation0 [shape = 'u32[]', space=smem, size = 0x4, offset = 0x4, fixed_abs, tag = 'smem constant byte address 0x4 - core index']
  #allocation1 [shape = 'u32[144,128]{1,0:T(1,128)}', space=vmem, size = 0x12000, scoped, tag = 'internal scratch']
  #allocation2 [shape = 'f32[256,128]{1,0:T(8,128)}', space=vmem, size = 0x20000, scoped, tag = 'scratch operand']
  %s0 = inlined_call_operand.vmem [shape: bf16[512,32], index: 0, kind: input, shape index: {}]
  %s1 = inlined_call_operand.vmem [shape: bf16[32,128], index: 1, kind: input, shape index: {}]
  %s2 = inlined_call_operand.vmem [shape: f32[1,128], index: 2, kind: input, shape index: {}]
  %s3 = inlined_call_operand.vmem [shape: f32[1,128], index: 3, kind: input, shape index: {}]
  %s4 = inlined_call_operand.hbm [shape: bf16[512,128], index: 4, kind: output, shape index: {}]
  %s5 = sld [smem:[#allocation0]]
  $region57: #{tpu_custom_call.1} parent=0
    _
  %s7 = ssub.s32 1, %s5
  %s8 = scalar_select 0, %s7, %s5
  $region1: #{tpu_custom_call.1} parent=0
    #allocation3 [shape = 'u8[131072]{0}', space=vmem, size = 0x20000, scoped, tag = 'output window, operand 0']
    #allocation4 [shape = 's32[2]{0}', space=sflag, size = 0x8, scoped, tag = 'scoped memory for tpu_custom_call.1']
    %9 = vsyncpa [#allocation4], 0
    %s10 = scalar_lea.sflag [#allocation4], 1
    %11 = vsyncpa %s10, 0
    loop: start=0, step=1, limit=4
    $region2: #{tpu_custom_call.1} parent=1 // loop_pre_header
      _
    $region3: #{tpu_custom_call.1} parent=1 // loop_header
      %s13 = sphi 0, %s17
      %p14 = scmp.ge.s32.totalorder %s13, 4
      %s20 = sphi 0, %s39
      %s21 = sphi 0, %s35
      %s22 = sphi 0, %s31
      %s23 = sphi 0, %s20
      %s24 = sphi 0, %s21
      %s25 = sphi 0, %s22
      %s26 = sphi 0, %s23
      %s27 = sphi 0, %s24
      %s28 = sphi 0, %s25
      %s44 = sphi 0, %s46
      %s47 = sphi 0, %s44
      %s48 = sphi 0, %s47
      %s64 = sphi 0, %s48
      %s72 = sphi 0, %s74
      %s75 = sphi 0, %s72
      %s76 = sphi 0, %s75
      %s92 = sphi 0, %s76
      %s98 = sphi 0, %s100
      %s101 = sphi 0, %s98
      %s102 = sphi 0, %s101
      %s118 = sphi 0, %s102
      %s124 = sphi 0, %s126
      %s127 = sphi 0, %s124
      %s128 = sphi 0, %s127
      %s144 = sphi 0, %s128
      %s152 = sphi 0, %s154
      %s155 = sphi 0, %s152
      %s156 = sphi 0, %s155
      %s172 = sphi 0, %s156
    $region4: #{tpu_custom_call.1} parent=1 // loop_header_branch
      %16 = sbr.rel (%p14) target = $region8
    $region5: #{tpu_custom_call.1} parent=1 // loop_body
      %s18 = ssub.s32 %s13, 1
      %s19 = ssub.s32 %s13, 2
      %s29 = sadd.s32 1, %s22
      %p30 = scmp.ge.s32.totalorder %s29, 1
      %s31 = scalar_select %p30, 0, %s29
      %s32 = sadd.s32 1, %s21
      %s33 = scalar_select %p30, %s32, %s21
      %p34 = scmp.ge.s32.totalorder %s33, 1
      %s35 = scalar_select %p34, 0, %s33
      %s36 = sadd.s32 1, %s20
      %s37 = scalar_select %p34, %s36, %s20
      %p38 = scmp.ge.s32.totalorder %s37, 2
      %s39 = scalar_select %p38, 0, %s37
      %s40 = ssub.s32 %s20, %s39
      %s41 = ssub.s32 %s22, %s31
      %s42 = sor.u32 %s40, %s41
      %p43 = scmp.eq.s32.totalorder %s42, 0
      %s45 = sadd.s32 %s44, 1
      %s46 = scalar_select %p43, %s44, %s45
      %p49 = pneg %p43
      %p50 = scmp.eq.s32.totalorder %s13, 1
      %p51 = por %p49, %p50
      %p52 = scmp.ne.s32.totalorder %s44, %s47
      %p53 = scmp.eq.s32.totalorder %s13, 0
      %p54 = por %p52, %p53
      %p55 = scmp.ne.s32.totalorder %s44, %s47
      %p56 = scmp.eq.s32.totalorder %s18, 1
      %p57 = por %p55, %p56
      %p58 = scmp.ne.s32.totalorder %s47, %s48
      %p59 = scmp.eq.s32.totalorder %s18, 0
      %p60 = por %p58, %p59
      %p61 = scmp.ne.s32.totalorder %s47, %s48
      %p62 = scmp.eq.s32.totalorder %s19, 1
      %p63 = por %p61, %p62
      %p65 = scmp.ne.s32.totalorder %s48, %s64
      %p66 = scmp.eq.s32.totalorder %s19, 0
      %p67 = por %p65, %p66
      %s68 = ssub.s32 %s22, %s31
      %s69 = ssub.s32 %s21, %s35
      %s70 = sor.u32 %s68, %s69
      %p71 = scmp.eq.s32.totalorder %s70, 0
      %s73 = sadd.s32 %s72, 1
      %s74 = scalar_select %p71, %s72, %s73
      %p77 = pneg %p71
      %p78 = scmp.eq.s32.totalorder %s13, 1
      %p79 = por %p77, %p78
      %p80 = scmp.ne.s32.totalorder %s72, %s75
      %p81 = scmp.eq.s32.totalorder %s13, 0
      %p82 = por %p80, %p81
      %p83 = scmp.ne.s32.totalorder %s72, %s75
      %p84 = scmp.eq.s32.totalorder %s18, 1
      %p85 = por %p83, %p84
      %p86 = scmp.ne.s32.totalorder %s75, %s76
      %p87 = scmp.eq.s32.totalorder %s18, 0
      %p88 = por %p86, %p87
      %p89 = scmp.ne.s32.totalorder %s75, %s76
      %p90 = scmp.eq.s32.totalorder %s19, 1
      %p91 = por %p89, %p90
      %p93 = scmp.ne.s32.totalorder %s76, %s92
      %p94 = scmp.eq.s32.totalorder %s19, 0
      %p95 = por %p93, %p94
      %s96 = ssub.s32 %s21, %s35
      %p97 = scmp.eq.s32.totalorder %s96, 0
      %s99 = sadd.s32 %s98, 1
      %s100 = scalar_select %p97, %s98, %s99
      %p103 = pneg %p97
      %p104 = scmp.eq.s32.totalorder %s13, 1
      %p105 = por %p103, %p104
      %p106 = scmp.ne.s32.totalorder %s98, %s101
      %p107 = scmp.eq.s32.totalorder %s13, 0
      %p108 = por %p106, %p107
      %p109 = scmp.ne.s32.totalorder %s98, %s101
      %p110 = scmp.eq.s32.totalorder %s18, 1
      %p111 = por %p109, %p110
      %p112 = scmp.ne.s32.totalorder %s101, %s102
      %p113 = scmp.eq.s32.totalorder %s18, 0
      %p114 = por %p112, %p113
      %p115 = scmp.ne.s32.totalorder %s101, %s102
      %p116 = scmp.eq.s32.totalorder %s19, 1
      %p117 = por %p115, %p116
      %p119 = scmp.ne.s32.totalorder %s102, %s118
      %p120 = scmp.eq.s32.totalorder %s19, 0
      %p121 = por %p119, %p120
      %s122 = ssub.s32 %s21, %s35
      %p123 = scmp.eq.s32.totalorder %s122, 0
      %s125 = sadd.s32 %s124, 1
      %s126 = scalar_select %p123, %s124, %s125
      %p129 = pneg %p123
      %p130 = scmp.eq.s32.totalorder %s13, 1
      %p131 = por %p129, %p130
      %p132 = scmp.ne.s32.totalorder %s124, %s127
      %p133 = scmp.eq.s32.totalorder %s13, 0
      %p134 = por %p132, %p133
      %p135 = scmp.ne.s32.totalorder %s124, %s127
      %p136 = scmp.eq.s32.totalorder %s18, 1
      %p137 = por %p135, %p136
      %p138 = scmp.ne.s32.totalorder %s127, %s128
      %p139 = scmp.eq.s32.totalorder %s18, 0
      %p140 = por %p138, %p139
      %p141 = scmp.ne.s32.totalorder %s127, %s128
      %p142 = scmp.eq.s32.totalorder %s19, 1
      %p143 = por %p141, %p142
      %p145 = scmp.ne.s32.totalorder %s128, %s144
      %p146 = scmp.eq.s32.totalorder %s19, 0
      %p147 = por %p145, %p146
      %s148 = ssub.s32 %s20, %s39
      %s149 = ssub.s32 %s21, %s35
      %s150 = sor.u32 %s148, %s149
      %p151 = scmp.eq.s32.totalorder %s150, 0
      %s153 = sadd.s32 %s152, 1
      %s154 = scalar_select %p151, %s152, %s153
      %p157 = pneg %p151
      %p158 = scmp.eq.s32.totalorder %s13, 1
      %p159 = por %p157, %p158
      %p160 = scmp.ne.s32.totalorder %s152, %s155
      %p161 = scmp.eq.s32.totalorder %s13, 0
      %p162 = por %p160, %p161
      %p163 = scmp.ne.s32.totalorder %s152, %s155
      %p164 = scmp.eq.s32.totalorder %s18, 1
      %p165 = por %p163, %p164
      %p166 = scmp.ne.s32.totalorder %s155, %s156
      %p167 = scmp.eq.s32.totalorder %s18, 0
      %p168 = por %p166, %p167
      %p169 = scmp.ne.s32.totalorder %s155, %s156
      %p170 = scmp.eq.s32.totalorder %s19, 1
      %p171 = por %p169, %p170
      %p173 = scmp.ne.s32.totalorder %s156, %s172
      %p174 = scmp.eq.s32.totalorder %s19, 0
      %p175 = por %p173, %p174
      %p176 = scmp.le.s32.totalorder 1, %s13
      %p177 = scmp.lt.s32.totalorder %s13, 3
      %p178 = pnand %p176, %p177
      %p179 = pneg %p178
      // Predicated region
      $region9: #{tpu_custom_call.1} parent=5 // pred_check
        _
      $region10: #{tpu_custom_call.1} parent=5 // pred_check_branch
        %181 = sbr.rel (%p178) target = $region12
      $region11: #{tpu_custom_call.1} parent=5 // pred_region
        %s182 = ssub.s32 %s13, 1
        // Predicated region
        $region13: #{tpu_custom_call.1} parent=11 // pred_check
          %p183 = pneg %p88
        $region14: #{tpu_custom_call.1} parent=11 // pred_check_branch
          %185 = sbr.rel (%p183) target = $region16
        $region15: #{tpu_custom_call.1} parent=11 // pred_region
          %s186 = smul.u32 4, %s25
          %p187 = scmp.lt.s32.totalorder %s186, 3
          %s188 = scalar_select %p187, %s186, 3
          %p189 = scmp.lt.s32.totalorder %s24, 0
          %s190 = scalar_select %p189, %s24, 0
          %s191 = sadd.s32 %s190, %s188
          %s192 = smul.addr %s191, 4
          %s193 = scalar_lea.vmem %s1, %s192
          %s194 = smul.u32 4, %s25
        $region16: #{tpu_custom_call.1} parent=11 // pred_fallthru
          _
        // Predicated region
        $region17: #{tpu_custom_call.1} parent=11 // pred_check
          %p195 = pneg %p114
        $region18: #{tpu_custom_call.1} parent=11 // pred_check_branch
          %197 = sbr.rel (%p195) target = $region20
        $region19: #{tpu_custom_call.1} parent=11 // pred_region
          %p198 = scmp.lt.s32.totalorder %s24, 0
          %s199 = scalar_select %p198, %s24, 0
          %s200 = scalar_lea.vmem %s2, %s199
        $region20: #{tpu_custom_call.1} parent=11 // pred_fallthru
          _
        // Predicated region
        $region21: #{tpu_custom_call.1} parent=11 // pred_check
          %p201 = pneg %p140
        $region22: #{tpu_custom_call.1} parent=11 // pred_check_branch
          %203 = sbr.rel (%p201) target = $region24
        $region23: #{tpu_custom_call.1} parent=11 // pred_region
          %p204 = scmp.lt.s32.totalorder %s24, 0
          %s205 = scalar_select %p204, %s24, 0
          %s206 = scalar_lea.vmem %s3, %s205
        $region24: #{tpu_custom_call.1} parent=11 // pred_fallthru
          _
      $region12: #{tpu_custom_call.1} parent=5 // pred_fallthru
        _
      %p207 = scmp.lt.s32.totalorder %s13, 2
      // Predicated region
      $region25: #{tpu_custom_call.1} parent=5 // pred_check
        %p208 = pneg %p207
      $region26: #{tpu_custom_call.1} parent=5 // pred_check_branch
        %210 = sbr.rel (%p208) target = $region28
      $region27: #{tpu_custom_call.1} parent=5 // pred_region
        // Predicated region
        $region29: #{tpu_custom_call.1} parent=27 // pred_check
          %p211 = pneg %p54
        $region30: #{tpu_custom_call.1} parent=27 // pred_check_branch
          %213 = sbr.rel (%p211) target = $region32
        $region31: #{tpu_custom_call.1} parent=27 // pred_region
          %s214 = smul.u32 32, %s20
          %p215 = scmp.lt.s32.totalorder %s214, 63
          %s216 = scalar_select %p215, %s214, 63
          %p217 = scmp.lt.s32.totalorder %s22, 0
          %s218 = scalar_select %p217, %s22, 0
          %s219 = sadd.s32 %s218, %s216
          %s220 = smul.addr %s219, 4
          %s221 = scalar_lea.vmem %s0, %s220
          %s222 = smul.u32 32, %s20
        $region32: #{tpu_custom_call.1} parent=27 // pred_fallthru
          _
      $region28: #{tpu_custom_call.1} parent=5 // pred_fallthru
        _
      %p223 = scmp.le.s32.totalorder 1, %s13
      %p224 = scmp.lt.s32.totalorder %s13, 3
      %p225 = pnand %p223, %p224
      %p226 = pneg %p225
      // Predicated region
      $region33: #{tpu_custom_call.1} parent=5 // pred_check
        _
      $region34: #{tpu_custom_call.1} parent=5 // pred_check_branch
        %228 = sbr.rel (%p225) target = $region36
      $region35: #{tpu_custom_call.1} parent=5 // pred_region
        %s229 = ssub.s32 %s13, 1
        %s230 = smul.u32 32, %s23
        %p231 = scmp.lt.s32.totalorder %s230, 63
        %s232 = scalar_select %p231, %s230, 63
        %p233 = scmp.lt.s32.totalorder %s25, 0
        %s234 = scalar_select %p233, %s25, 0
        %s235 = sadd.s32 %s234, %s232
        %s236 = smul.addr %s235, 4
        %s237 = scalar_lea.vmem %s0, %s236
        %p238 = pneg %p60
        %p239 = pneg %p57
        %s240 = smul.u32 4, %s25
        %p241 = scmp.lt.s32.totalorder %s240, 3
        %s242 = scalar_select %p241, %s240, 3
        %p243 = scmp.lt.s32.totalorder %s24, 0
        %s244 = scalar_select %p243, %s24, 0
        %s245 = sadd.s32 %s244, %s242
        %s246 = smul.addr %s245, 4
        %s247 = scalar_lea.vmem %s1, %s246
        %p248 = pneg %p88
        %p249 = pneg %p85
        %p250 = scmp.lt.s32.totalorder %s24, 0
        %s251 = scalar_select %p250, %s24, 0
        %s252 = scalar_lea.vmem %s2, %s251
        %p253 = pneg %p114
        %p254 = pneg %p111
        %p255 = scmp.lt.s32.totalorder %s24, 0
        %s256 = scalar_select %p255, %s24, 0
        %s257 = scalar_lea.vmem %s3, %s256
        %p258 = pneg %p140
        %p259 = pneg %p137
        %p260 = pneg %p168
        %p261 = pneg %p165
        %s262 = sand.u32 %s155, 1
        %s263 = scalar_lea.sflag [#allocation4], %s262
        %s264 = sand.u32 %s155, 1
        %s265 = smul.addr %s264, 128
        %s266 = scalar_lea.vmem [#allocation3], %s265
        %s267 = smul.u32 32, %s23
        %p268 = scmp.lt.s32.totalorder %s267, 63
        %s269 = scalar_select %p268, %s267, 63
        %p270 = scmp.lt.s32.totalorder %s25, 0
        %s271 = scalar_select %p270, %s25, 0
        %s272 = sadd.s32 %s271, %s269
        %s273 = smul.addr %s272, 4
        %s274 = scalar_lea.vmem %s0, %s273
        %s275 = smul.u32 32, %s23
        %s276 = smul.u32 4, %s25
        %p277 = scmp.lt.s32.totalorder %s276, 3
        %s278 = scalar_select %p277, %s276, 3
        %p279 = scmp.lt.s32.totalorder %s24, 0
        %s280 = scalar_select %p279, %s24, 0
        %s281 = sadd.s32 %s280, %s278
        %s282 = smul.addr %s281, 4
        %s283 = scalar_lea.vmem %s1, %s282
        %s284 = smul.u32 4, %s25
        %p285 = scmp.lt.s32.totalorder %s24, 0
        %s286 = scalar_select %p285, %s24, 0
        %s287 = scalar_lea.vmem %s2, %s286
        %p288 = scmp.lt.s32.totalorder %s24, 0
        %s289 = scalar_select %p288, %s24, 0
        %s290 = scalar_lea.vmem %s3, %s289
        %s291 = smul.u32 32, %s23
        %p293 = scmp.eq.s32.totalorder %s25, 0
        // Predicated region
        $region37: #{tpu_custom_call.1} parent=35 // pred_check
          %p294 = pneg %p293
        $region38: #{tpu_custom_call.1} parent=35 // pred_check_branch
          %296 = sbr.rel (%p294) target = $region40
        $region39: #{tpu_custom_call.1} parent=35 // pred_region
          %297 = vst [vmem:[#allocation2] sm:$0xff] 0.0
          %298 = vst [vmem:[#allocation2 + $0x8] sm:$0xff] 0.0
          %299 = vst [vmem:[#allocation2 + $0x10] sm:$0xff] 0.0
          %300 = vst [vmem:[#allocation2 + $0x18] sm:$0xff] 0.0
          %301 = vst [vmem:[#allocation2 + $0x20] sm:$0xff] 0.0
          %302 = vst [vmem:[#allocation2 + $0x28] sm:$0xff] 0.0
          %303 = vst [vmem:[#allocation2 + $0x30] sm:$0xff] 0.0
          %304 = vst [vmem:[#allocation2 + $0x38] sm:$0xff] 0.0
          %305 = vst [vmem:[#allocation2 + $0x40] sm:$0xff] 0.0
          %306 = vst [vmem:[#allocation2 + $0x48] sm:$0xff] 0.0
          %307 = vst [vmem:[#allocation2 + $0x50] sm:$0xff] 0.0
          %308 = vst [vmem:[#allocation2 + $0x58] sm:$0xff] 0.0
          %309 = vst [vmem:[#allocation2 + $0x60] sm:$0xff] 0.0
          %310 = vst [vmem:[#allocation2 + $0x68] sm:$0xff] 0.0
          %311 = vst [vmem:[#allocation2 + $0x70] sm:$0xff] 0.0
          %312 = vst [vmem:[#allocation2 + $0x78] sm:$0xff] 0.0
          %313 = vst [vmem:[#allocation2 + $0x80] sm:$0xff] 0.0
          %314 = vst [vmem:[#allocation2 + $0x88] sm:$0xff] 0.0
          %315 = vst [vmem:[#allocation2 + $0x90] sm:$0xff] 0.0
          %316 = vst [vmem:[#allocation2 + $0x98] sm:$0xff] 0.0
          %317 = vst [vmem:[#allocation2 + $0xa0] sm:$0xff] 0.0
          %318 = vst [vmem:[#allocation2 + $0xa8] sm:$0xff] 0.0
          %319 = vst [vmem:[#allocation2 + $0xb0] sm:$0xff] 0.0
          %320 = vst [vmem:[#allocation2 + $0xb8] sm:$0xff] 0.0
          %321 = vst [vmem:[#allocation2 + $0xc0] sm:$0xff] 0.0
          %322 = vst [vmem:[#allocation2 + $0xc8] sm:$0xff] 0.0
          %323 = vst [vmem:[#allocation2 + $0xd0] sm:$0xff] 0.0
          %324 = vst [vmem:[#allocation2 + $0xd8] sm:$0xff] 0.0
          %325 = vst [vmem:[#allocation2 + $0xe0] sm:$0xff] 0.0
          %326 = vst [vmem:[#allocation2 + $0xe8] sm:$0xff] 0.0
          %327 = vst [vmem:[#allocation2 + $0xf0] sm:$0xff] 0.0
          %328 = vst [vmem:[#allocation2 + $0xf8] sm:$0xff] 0.0
        $region40: #{tpu_custom_call.1} parent=35 // pred_fallthru
          _
        %v329 = vld [vmem:[#allocation2] sm:$0xff]
        %v330 = vld [vmem:[#allocation2 + $0x8] sm:$0xff]
        %v331 = vld [vmem:[#allocation2 + $0x10] sm:$0xff]
        %v332 = vld [vmem:[#allocation2 + $0x18] sm:$0xff]
        %v333 = vld [vmem:[#allocation2 + $0x20] sm:$0xff]
        %v334 = vld [vmem:[#allocation2 + $0x28] sm:$0xff]
        %v335 = vld [vmem:[#allocation2 + $0x30] sm:$0xff]
        %v336 = vld [vmem:[#allocation2 + $0x38] sm:$0xff]
        %v337 = vld [vmem:[#allocation2 + $0x40] sm:$0xff]
        %v338 = vld [vmem:[#allocation2 + $0x48] sm:$0xff]
        %v339 = vld [vmem:[#allocation2 + $0x50] sm:$0xff]
        %v340 = vld [vmem:[#allocation2 + $0x58] sm:$0xff]
        %v341 = vld [vmem:[#allocation2 + $0x60] sm:$0xff]
        %v342 = vld [vmem:[#allocation2 + $0x68] sm:$0xff]
        %v343 = vld [vmem:[#allocation2 + $0x70] sm:$0xff]
        %v344 = vld [vmem:[#allocation2 + $0x78] sm:$0xff]
        %v345 = vld [vmem:[#allocation2 + $0x80] sm:$0xff]
        %v346 = vld [vmem:[#allocation2 + $0x88] sm:$0xff]
        %v347 = vld [vmem:[#allocation2 + $0x90] sm:$0xff]
        %v348 = vld [vmem:[#allocation2 + $0x98] sm:$0xff]
        %v349 = vld [vmem:[#allocation2 + $0xa0] sm:$0xff]
        %v350 = vld [vmem:[#allocation2 + $0xa8] sm:$0xff]
        %v351 = vld [vmem:[#allocation2 + $0xb0] sm:$0xff]
        %v352 = vld [vmem:[#allocation2 + $0xb8] sm:$0xff]
        %v353 = vld [vmem:[#allocation2 + $0xc0] sm:$0xff]
        %v354 = vld [vmem:[#allocation2 + $0xc8] sm:$0xff]
        %v355 = vld [vmem:[#allocation2 + $0xd0] sm:$0xff]
        %v356 = vld [vmem:[#allocation2 + $0xd8] sm:$0xff]
        %v357 = vld [vmem:[#allocation2 + $0xe0] sm:$0xff]
        %v358 = vld [vmem:[#allocation2 + $0xe8] sm:$0xff]
        %v359 = vld [vmem:[#allocation2 + $0xf0] sm:$0xff]
        %v360 = vld [vmem:[#allocation2 + $0xf8] sm:$0xff]
        %v361 = vld [vmem:[%s274] sm:$0xf]
        %v362 = vld [vmem:[%s274 + $0x4] sm:$0xf]
        %v363 = vld [vmem:[%s274 + $0x8] sm:$0xf]
        %v364 = vld [vmem:[%s274 + $0xc] sm:$0xf]
        %v365 = vld [vmem:[%s274 + $0x10] sm:$0xf]
        %v366 = vld [vmem:[%s274 + $0x14] sm:$0xf]
        %v367 = vld [vmem:[%s274 + $0x18] sm:$0xf]
        %v368 = vld [vmem:[%s274 + $0x1c] sm:$0xf]
        %v369 = vld [vmem:[%s274 + $0x20] sm:$0xf]
        %v370 = vld [vmem:[%s274 + $0x24] sm:$0xf]
        %v371 = vld [vmem:[%s274 + $0x28] sm:$0xf]
        %v372 = vld [vmem:[%s274 + $0x2c] sm:$0xf]
        %v373 = vld [vmem:[%s274 + $0x30] sm:$0xf]
        %v374 = vld [vmem:[%s274 + $0x34] sm:$0xf]
        %v375 = vld [vmem:[%s274 + $0x38] sm:$0xf]
        %v376 = vld [vmem:[%s274 + $0x3c] sm:$0xf]
        %v377 = vld [vmem:[%s274 + $0x40] sm:$0xf]
        %v378 = vld [vmem:[%s274 + $0x44] sm:$0xf]
        %v379 = vld [vmem:[%s274 + $0x48] sm:$0xf]
        %v380 = vld [vmem:[%s274 + $0x4c] sm:$0xf]
        %v381 = vld [vmem:[%s274 + $0x50] sm:$0xf]
        %v382 = vld [vmem:[%s274 + $0x54] sm:$0xf]
        %v383 = vld [vmem:[%s274 + $0x58] sm:$0xf]
        %v384 = vld [vmem:[%s274 + $0x5c] sm:$0xf]
        %v385 = vld [vmem:[%s274 + $0x60] sm:$0xf]
        %v386 = vld [vmem:[%s274 + $0x64] sm:$0xf]
        %v387 = vld [vmem:[%s274 + $0x68] sm:$0xf]
        %v388 = vld [vmem:[%s274 + $0x6c] sm:$0xf]
        %v389 = vld [vmem:[%s274 + $0x70] sm:$0xf]
        %v390 = vld [vmem:[%s274 + $0x74] sm:$0xf]
        %v391 = vld [vmem:[%s274 + $0x78] sm:$0xf]
        %v392 = vld [vmem:[%s274 + $0x7c] sm:$0xf]
        %v393 = vld [vmem:[%s283] sm:$0xf]
        %v394 = vld [vmem:[%s283 + $0x4] sm:$0xf]
        %v395 = vld [vmem:[%s283 + $0x8] sm:$0xf]
        %v396 = vld [vmem:[%s283 + $0xc] sm:$0xf]
        %v429 = vunpack.c.l.b16 %v361
        %v430 = vunpack.c.l.b16 %v362
        %v431 = vunpack.c.l.b16 %v363
        %v432 = vunpack.c.l.b16 %v364
        %v433 = vunpack.c.l.b16 %v365
        %v434 = vunpack.c.l.b16 %v366
        %v435 = vunpack.c.l.b16 %v367
        %v436 = vunpack.c.l.b16 %v368
        %v437 = vunpack.c.l.b16 %v369
        %v438 = vunpack.c.l.b16 %v370
        %v439 = vunpack.c.l.b16 %v371
        %v440 = vunpack.c.l.b16 %v372
        %v441 = vunpack.c.l.b16 %v373
        %v442 = vunpack.c.l.b16 %v374
        %v443 = vunpack.c.l.b16 %v375
        %v444 = vunpack.c.l.b16 %v376
        %v445 = vunpack.c.l.b16 %v377
        %v446 = vunpack.c.l.b16 %v378
        %v447 = vunpack.c.l.b16 %v379
        %v448 = vunpack.c.l.b16 %v380
        %v449 = vunpack.c.l.b16 %v381
        %v450 = vunpack.c.l.b16 %v382
        %v451 = vunpack.c.l.b16 %v383
        %v452 = vunpack.c.l.b16 %v384
        %v453 = vunpack.c.l.b16 %v385
        %v454 = vunpack.c.l.b16 %v386
        %v455 = vunpack.c.l.b16 %v387
        %v456 = vunpack.c.l.b16 %v388
        %v457 = vunpack.c.l.b16 %v389
        %v458 = vunpack.c.l.b16 %v390
        %v459 = vunpack.c.l.b16 %v391
        %v460 = vunpack.c.l.b16 %v392
        %v461 = vpack.c.b16 %v430, %v429
        %v462 = vpack.c.b16 %v432, %v431
        %v463 = vpack.c.b16 %v434, %v433
        %v464 = vpack.c.b16 %v436, %v435
        %v465 = vpack.c.b16 %v438, %v437
        %v466 = vpack.c.b16 %v440, %v439
        %v467 = vpack.c.b16 %v442, %v441
        %v468 = vpack.c.b16 %v444, %v443
        %v469 = vpack.c.b16 %v446, %v445
        %v470 = vpack.c.b16 %v448, %v447
        %v471 = vpack.c.b16 %v450, %v449
        %v472 = vpack.c.b16 %v452, %v451
        %v473 = vpack.c.b16 %v454, %v453
        %v474 = vpack.c.b16 %v456, %v455
        %v475 = vpack.c.b16 %v458, %v457
        %v476 = vpack.c.b16 %v460, %v459
        %v481 = vunpack.c.l.b16 %v393
        %v482 = vunpack.c.l.b16 %v394
        %v483 = vunpack.c.l.b16 %v395
        %v484 = vunpack.c.l.b16 %v396
        %v485 = vpack.c.b16 %v482, %v481
        %v486 = vpack.c.b16 %v484, %v483
        %vm489 = vcmask 261120
        %v491 = vsel %vm489, %v461, 0
        %v494 = vsel %vm489, %v462, 0
        %v497 = vsel %vm489, %v463, 0
        %v500 = vsel %vm489, %v464, 0
        %v503 = vsel %vm489, %v465, 0
        %v506 = vsel %vm489, %v466, 0
        %v509 = vsel %vm489, %v467, 0
        %v512 = vsel %vm489, %v468, 0
        %v515 = vsel %vm489, %v469, 0
        %v518 = vsel %vm489, %v470, 0
        %v521 = vsel %vm489, %v471, 0
        %v524 = vsel %vm489, %v472, 0
        %v527 = vsel %vm489, %v473, 0
        %v530 = vsel %vm489, %v474, 0
        %v533 = vsel %vm489, %v475, 0
        %v536 = vsel %vm489, %v476, 0
        %538 = vmatprep.subr.bf16.mxu0 0
        %539 = vmatpush1.bf16.msra.mxu0 %v485
        %540 = vmatprep.subr.bf16.mxu0 0
        %541 = vmatpush1.bf16.msra.mxu0 %v486
        %542 = vmatprep.subr.bf16.mxu0 0
        %543 = vmatpush1.bf16.msra.mxu0 0
        %544 = vmatprep.subr.bf16.mxu0 0
        %545 = vmatpush1.bf16.msra.mxu0 0
        %546 = vmatprep.subr.bf16.mxu0 0
        %547 = vmatpush1.bf16.msra.mxu0 0
        %548 = vmatprep.subr.bf16.mxu0 0
        %549 = vmatpush1.bf16.msra.mxu0 0
        %550 = vmatprep.subr.bf16.mxu0 0
        %551 = vmatpush1.bf16.msra.mxu0 0
        %552 = vmatprep.subr.bf16.mxu0 0
        %553 = vmatpush1.bf16.msra.mxu0 0
        %554 = vmatprep.subr.bf16.mxu0 0
        %555 = vmatpush1.bf16.msra.mxu0 0
        %556 = vmatprep.subr.bf16.mxu0 0
        %557 = vmatpush1.bf16.msra.mxu0 0
        %558 = vmatprep.subr.bf16.mxu0 0
        %559 = vmatpush1.bf16.msra.mxu0 0
        %560 = vmatprep.subr.bf16.mxu0 0
        %561 = vmatpush1.bf16.msra.mxu0 0
        %562 = vmatprep.subr.bf16.mxu0 0
        %563 = vmatpush1.bf16.msra.mxu0 0
        %564 = vmatprep.subr.bf16.mxu0 0
        %565 = vmatpush1.bf16.msra.mxu0 0
        %566 = vmatprep.subr.bf16.mxu0 0
        %567 = vmatpush1.bf16.msra.mxu0 0
        %568 = vmatprep.subr.bf16.mxu0 0
        %569 = vmatpush1.bf16.msra.mxu0 0
        %570 = vmatprep.mubr.bf16.mxu0 0
        %571 = vmatmul.mubr.bf16.gmra.mrb[0].mxu0 %v491
        %v572 = vpop.f32.mrb[0].mxu0
        %v573 = vadd.f32 0.0, %v572
        %v574 = vpop.f32.mrb[0].mxu0
        %v575 = vpop.f32.mrb[0].mxu0
        %v576 = vadd.f32 0.0, %v575
        %v577 = vpop.f32.mrb[0].mxu0
        %578 = vmatprep.mubr.bf16.mxu0 0
        %579 = vmatmul.mubr.bf16.gmra.mrb[0].mxu0 %v494
        %v580 = vpop.f32.mrb[0].mxu0
        %v581 = vadd.f32 0.0, %v580
        %v582 = vpop.f32.mrb[0].mxu0
        %v583 = vpop.f32.mrb[0].mxu0
        %v584 = vadd.f32 0.0, %v583
        %v585 = vpop.f32.mrb[0].mxu0
        %586 = vmatprep.mubr.bf16.mxu0 0
        %587 = vmatmul.mubr.bf16.gmra.mrb[0].mxu0 %v497
        %v588 = vpop.f32.mrb[0].mxu0
        %v589 = vadd.f32 0.0, %v588
        %v590 = vpop.f32.mrb[0].mxu0
        %v591 = vpop.f32.mrb[0].mxu0
        %v592 = vadd.f32 0.0, %v591
        %v593 = vpop.f32.mrb[0].mxu0
        %594 = vmatprep.mubr.bf16.mxu0 0
        %595 = vmatmul.mubr.bf16.gmra.mrb[0].mxu0 %v500
        %v596 = vpop.f32.mrb[0].mxu0
        %v597 = vadd.f32 0.0, %v596
        %v598 = vpop.f32.mrb[0].mxu0
        %v599 = vpop.f32.mrb[0].mxu0
        %v600 = vadd.f32 0.0, %v599
        %v601 = vpop.f32.mrb[0].mxu0
        %602 = vmatprep.mubr.bf16.mxu0 0
        %603 = vmatmul.mubr.bf16.gmra.mrb[0].mxu0 %v503
        %v604 = vpop.f32.mrb[0].mxu0
        %v605 = vadd.f32 0.0, %v604
        %v606 = vpop.f32.mrb[0].mxu0
        %v607 = vpop.f32.mrb[0].mxu0
        %v608 = vadd.f32 0.0, %v607
        %v609 = vpop.f32.mrb[0].mxu0
        %610 = vmatprep.mubr.bf16.mxu0 0
        %611 = vmatmul.mubr.bf16.gmra.mrb[0].mxu0 %v506
        %v612 = vpop.f32.mrb[0].mxu0
        %v613 = vadd.f32 0.0, %v612
        %v614 = vpop.f32.mrb[0].mxu0
        %v615 = vpop.f32.mrb[0].mxu0
        %v616 = vadd.f32 0.0, %v615
        %v617 = vpop.f32.mrb[0].mxu0
        %618 = vmatprep.mubr.bf16.mxu0 0
        %619 = vmatmul.mubr.bf16.gmra.mrb[0].mxu0 %v509
        %v620 = vpop.f32.mrb[0].mxu0
        %v621 = vadd.f32 0.0, %v620
        %v622 = vpop.f32.mrb[0].mxu0
        %v623 = vpop.f32.mrb[0].mxu0
        %v624 = vadd.f32 0.0, %v623
        %v625 = vpop.f32.mrb[0].mxu0
        %626 = vmatprep.mubr.bf16.mxu0 0
        %627 = vmatmul.mubr.bf16.gmra.mrb[0].mxu0 %v512
        %v628 = vpop.f32.mrb[0].mxu0
        %v629 = vadd.f32 0.0, %v628
        %v630 = vpop.f32.mrb[0].mxu0
        %v631 = vpop.f32.mrb[0].mxu0
        %v632 = vadd.f32 0.0, %v631
        %v633 = vpop.f32.mrb[0].mxu0
        %634 = vmatprep.mubr.bf16.mxu0 0
        %635 = vmatmul.mubr.bf16.gmra.mrb[0].mxu0 %v515
        %v636 = vpop.f32.mrb[0].mxu0
        %v637 = vadd.f32 0.0, %v636
        %v638 = vpop.f32.mrb[0].mxu0
        %v639 = vpop.f32.mrb[0].mxu0
        %v640 = vadd.f32 0.0, %v639
        %v641 = vpop.f32.mrb[0].mxu0
        %642 = vmatprep.mubr.bf16.mxu0 0
        %643 = vmatmul.mubr.bf16.gmra.mrb[0].mxu0 %v518
        %v644 = vpop.f32.mrb[0].mxu0
        %v645 = vadd.f32 0.0, %v644
        %v646 = vpop.f32.mrb[0].mxu0
        %v647 = vpop.f32.mrb[0].mxu0
        %v648 = vadd.f32 0.0, %v647
        %v649 = vpop.f32.mrb[0].mxu0
        %650 = vmatprep.mubr.bf16.mxu0 0
        %651 = vmatmul.mubr.bf16.gmra.mrb[0].mxu0 %v521
        %v652 = vpop.f32.mrb[0].mxu0
        %v653 = vadd.f32 0.0, %v652
        %v654 = vpop.f32.mrb[0].mxu0
        %v655 = vpop.f32.mrb[0].mxu0
        %v656 = vadd.f32 0.0, %v655
        %v657 = vpop.f32.mrb[0].mxu0
        %658 = vmatprep.mubr.bf16.mxu0 0
        %659 = vmatmul.mubr.bf16.gmra.mrb[0].mxu0 %v524
        %v660 = vpop.f32.mrb[0].mxu0
        %v661 = vadd.f32 0.0, %v660
        %v662 = vpop.f32.mrb[0].mxu0
        %v663 = vpop.f32.mrb[0].mxu0
        %v664 = vadd.f32 0.0, %v663
        %v665 = vpop.f32.mrb[0].mxu0
        %666 = vmatprep.mubr.bf16.mxu0 0
        %667 = vmatmul.mubr.bf16.gmra.mrb[0].mxu0 %v527
        %v668 = vpop.f32.mrb[0].mxu0
        %v669 = vadd.f32 0.0, %v668
        %v670 = vpop.f32.mrb[0].mxu0
        %v671 = vpop.f32.mrb[0].mxu0
        %v672 = vadd.f32 0.0, %v671
        %v673 = vpop.f32.mrb[0].mxu0
        %674 = vmatprep.mubr.bf16.mxu0 0
        %675 = vmatmul.mubr.bf16.gmra.mrb[0].mxu0 %v530
        %v676 = vpop.f32.mrb[0].mxu0
        %v677 = vadd.f32 0.0, %v676
        %v678 = vpop.f32.mrb[0].mxu0
        %v679 = vpop.f32.mrb[0].mxu0
        %v680 = vadd.f32 0.0, %v679
        %v681 = vpop.f32.mrb[0].mxu0
        %682 = vmatprep.mubr.bf16.mxu0 0
        %683 = vmatmul.mubr.bf16.gmra.mrb[0].mxu0 %v533
        %v684 = vpop.f32.mrb[0].mxu0
        %v685 = vadd.f32 0.0, %v684
        %v686 = vpop.f32.mrb[0].mxu0
        %v687 = vpop.f32.mrb[0].mxu0
        %v688 = vadd.f32 0.0, %v687
        %v689 = vpop.f32.mrb[0].mxu0
        %690 = vmatprep.mubr.bf16.mxu0 0
        %691 = vmatmul.mubr.bf16.gmra.mrb[0].mxu0 %v536
        %v692 = vpop.f32.mrb[0].mxu0
        %v693 = vadd.f32 0.0, %v692
        %v694 = vpop.f32.mrb[0].mxu0
        %v695 = vpop.f32.mrb[0].mxu0
        %v696 = vadd.f32 0.0, %v695
        %v697 = vpop.f32.mrb[0].mxu0
        %698 = vdwg.mxu0
        %v699 = vadd.f32 %v329, %v573
        %v700 = vadd.f32 %v330, %v576
        %v701 = vadd.f32 %v331, %v581
        %v702 = vadd.f32 %v332, %v584
        %v703 = vadd.f32 %v333, %v589
        %v704 = vadd.f32 %v334, %v592
        %v705 = vadd.f32 %v335, %v597
        %v706 = vadd.f32 %v336, %v600
        %v707 = vadd.f32 %v337, %v605
        %v708 = vadd.f32 %v338, %v608
        %v709 = vadd.f32 %v339, %v613
        %v710 = vadd.f32 %v340, %v616
        %v711 = vadd.f32 %v341, %v621
        %v712 = vadd.f32 %v342, %v624
        %v713 = vadd.f32 %v343, %v629
        %v714 = vadd.f32 %v344, %v632
        %v715 = vadd.f32 %v345, %v637
        %v716 = vadd.f32 %v346, %v640
        %v717 = vadd.f32 %v347, %v645
        %v718 = vadd.f32 %v348, %v648
        %v719 = vadd.f32 %v349, %v653
        %v720 = vadd.f32 %v350, %v656
        %v721 = vadd.f32 %v351, %v661
        %v722 = vadd.f32 %v352, %v664
        %v723 = vadd.f32 %v353, %v669
        %v724 = vadd.f32 %v354, %v672
        %v725 = vadd.f32 %v355, %v677
        %v726 = vadd.f32 %v356, %v680
        %v727 = vadd.f32 %v357, %v685
        %v728 = vadd.f32 %v358, %v688
        %v729 = vadd.f32 %v359, %v693
        %v730 = vadd.f32 %v360, %v696
        %731 = vst [vmem:[#allocation2] sm:$0xff] %v699
        %732 = vst [vmem:[#allocation2 + $0x8] sm:$0xff] %v700
        %733 = vst [vmem:[#allocation2 + $0x10] sm:$0xff] %v701
        %734 = vst [vmem:[#allocation2 + $0x18] sm:$0xff] %v702
        %735 = vst [vmem:[#allocation2 + $0x20] sm:$0xff] %v703
        %736 = vst [vmem:[#allocation2 + $0x28] sm:$0xff] %v704
        %737 = vst [vmem:[#allocation2 + $0x30] sm:$0xff] %v705
        %738 = vst [vmem:[#allocation2 + $0x38] sm:$0xff] %v706
        %739 = vst [vmem:[#allocation2 + $0x40] sm:$0xff] %v707
        %740 = vst [vmem:[#allocation2 + $0x48] sm:$0xff] %v708
        %741 = vst [vmem:[#allocation2 + $0x50] sm:$0xff] %v709
        %742 = vst [vmem:[#allocation2 + $0x58] sm:$0xff] %v710
        %743 = vst [vmem:[#allocation2 + $0x60] sm:$0xff] %v711
        %744 = vst [vmem:[#allocation2 + $0x68] sm:$0xff] %v712
        %745 = vst [vmem:[#allocation2 + $0x70] sm:$0xff] %v713
        %746 = vst [vmem:[#allocation2 + $0x78] sm:$0xff] %v714
        %747 = vst [vmem:[#allocation2 + $0x80] sm:$0xff] %v715
        %748 = vst [vmem:[#allocation2 + $0x88] sm:$0xff] %v716
        %749 = vst [vmem:[#allocation2 + $0x90] sm:$0xff] %v717
        %750 = vst [vmem:[#allocation2 + $0x98] sm:$0xff] %v718
        %751 = vst [vmem:[#allocation2 + $0xa0] sm:$0xff] %v719
        %752 = vst [vmem:[#allocation2 + $0xa8] sm:$0xff] %v720
        %753 = vst [vmem:[#allocation2 + $0xb0] sm:$0xff] %v721
        %754 = vst [vmem:[#allocation2 + $0xb8] sm:$0xff] %v722
        %755 = vst [vmem:[#allocation2 + $0xc0] sm:$0xff] %v723
        %756 = vst [vmem:[#allocation2 + $0xc8] sm:$0xff] %v724
        %757 = vst [vmem:[#allocation2 + $0xd0] sm:$0xff] %v725
        %758 = vst [vmem:[#allocation2 + $0xd8] sm:$0xff] %v726
        %759 = vst [vmem:[#allocation2 + $0xe0] sm:$0xff] %v727
        %760 = vst [vmem:[#allocation2 + $0xe8] sm:$0xff] %v728
        %761 = vst [vmem:[#allocation2 + $0xf0] sm:$0xff] %v729
        %762 = vst [vmem:[#allocation2 + $0xf8] sm:$0xff] %v730
        // Predicated region
        $region41: #{tpu_custom_call.1} parent=35 // pred_check
          %p763 = pneg %p293
        $region42: #{tpu_custom_call.1} parent=35 // pred_check_branch
          %765 = sbr.rel (%p763) target = $region44
        $region43: #{tpu_custom_call.1} parent=35 // pred_region
          %v766 = vld [vmem:[#allocation2] sm:$0xff]
          %v767 = vld [vmem:[#allocation2 + $0x8] sm:$0xff]
          %v768 = vld [vmem:[#allocation2 + $0x10] sm:$0xff]
          %v769 = vld [vmem:[#allocation2 + $0x18] sm:$0xff]
          %v770 = vld [vmem:[#allocation2 + $0x20] sm:$0xff]
          %v771 = vld [vmem:[#allocation2 + $0x28] sm:$0xff]
          %v772 = vld [vmem:[#allocation2 + $0x30] sm:$0xff]
          %v773 = vld [vmem:[#allocation2 + $0x38] sm:$0xff]
          %v774 = vld [vmem:[#allocation2 + $0x40] sm:$0xff]
          %v775 = vld [vmem:[#allocation2 + $0x48] sm:$0xff]
          %v776 = vld [vmem:[#allocation2 + $0x50] sm:$0xff]
          %v777 = vld [vmem:[#allocation2 + $0x58] sm:$0xff]
          %v778 = vld [vmem:[#allocation2 + $0x60] sm:$0xff]
          %v779 = vld [vmem:[#allocation2 + $0x68] sm:$0xff]
          %v780 = vld [vmem:[#allocation2 + $0x70] sm:$0xff]
          %v781 = vld [vmem:[#allocation2 + $0x78] sm:$0xff]
          %v782 = vld [vmem:[#allocation2 + $0x80] sm:$0xff]
          %v783 = vld [vmem:[#allocation2 + $0x88] sm:$0xff]
          %v784 = vld [vmem:[#allocation2 + $0x90] sm:$0xff]
          %v785 = vld [vmem:[#allocation2 + $0x98] sm:$0xff]
          %v786 = vld [vmem:[#allocation2 + $0xa0] sm:$0xff]
          %v787 = vld [vmem:[#allocation2 + $0xa8] sm:$0xff]
          %v788 = vld [vmem:[#allocation2 + $0xb0] sm:$0xff]
          %v789 = vld [vmem:[#allocation2 + $0xb8] sm:$0xff]
          %v790 = vld [vmem:[#allocation2 + $0xc0] sm:$0xff]
          %v791 = vld [vmem:[#allocation2 + $0xc8] sm:$0xff]
          %v792 = vld [vmem:[#allocation2 + $0xd0] sm:$0xff]
          %v793 = vld [vmem:[#allocation2 + $0xd8] sm:$0xff]
          %v794 = vld [vmem:[#allocation2 + $0xe0] sm:$0xff]
          %v795 = vld [vmem:[#allocation2 + $0xe8] sm:$0xff]
          %v796 = vld [vmem:[#allocation2 + $0xf0] sm:$0xff]
          %v797 = vld [vmem:[#allocation2 + $0xf8] sm:$0xff]
          %v798 = vld [vmem:[%s287] sm:$0x1]
          %v800 = vlaneseq
          %v801 = vshrl.u32 %v800, 7
          %v802 = vsub.s32 0, %v801
          %v803 = vrot.slane %v798, %v802
          %v805 = vmul.f32 %v766, %v803
          %v806 = vmul.f32 %v767, %v803
          %v807 = vmul.f32 %v768, %v803
          %v808 = vmul.f32 %v769, %v803
          %v809 = vmul.f32 %v770, %v803
          %v810 = vmul.f32 %v771, %v803
          %v811 = vmul.f32 %v772, %v803
          %v812 = vmul.f32 %v773, %v803
          %v813 = vmul.f32 %v774, %v803
          %v814 = vmul.f32 %v775, %v803
          %v815 = vmul.f32 %v776, %v803
          %v816 = vmul.f32 %v777, %v803
          %v817 = vmul.f32 %v778, %v803
          %v818 = vmul.f32 %v779, %v803
          %v819 = vmul.f32 %v780, %v803
          %v820 = vmul.f32 %v781, %v803
          %v821 = vmul.f32 %v782, %v803
          %v822 = vmul.f32 %v783, %v803
          %v823 = vmul.f32 %v784, %v803
          %v824 = vmul.f32 %v785, %v803
          %v825 = vmul.f32 %v786, %v803
          %v826 = vmul.f32 %v787, %v803
          %v827 = vmul.f32 %v788, %v803
          %v828 = vmul.f32 %v789, %v803
          %v829 = vmul.f32 %v790, %v803
          %v830 = vmul.f32 %v791, %v803
          %v831 = vmul.f32 %v792, %v803
          %v832 = vmul.f32 %v793, %v803
          %v833 = vmul.f32 %v794, %v803
          %v834 = vmul.f32 %v795, %v803
          %v835 = vmul.f32 %v796, %v803
          %v836 = vmul.f32 %v797, %v803
          %v837 = vld [vmem:[%s290] sm:$0x1]
          %v839 = vlaneseq
          %v840 = vshrl.u32 %v839, 7
          %v841 = vsub.s32 0, %v840
          %v842 = vrot.slane %v837, %v841
          %v844 = vadd.f32 %v805, %v842
          %v845 = vadd.f32 %v806, %v842
          %v846 = vadd.f32 %v807, %v842
          %v847 = vadd.f32 %v808, %v842
          %v848 = vadd.f32 %v809, %v842
          %v849 = vadd.f32 %v810, %v842
          %v850 = vadd.f32 %v811, %v842
          %v851 = vadd.f32 %v812, %v842
          %v852 = vadd.f32 %v813, %v842
          %v853 = vadd.f32 %v814, %v842
          %v854 = vadd.f32 %v815, %v842
          %v855 = vadd.f32 %v816, %v842
          %v856 = vadd.f32 %v817, %v842
          %v857 = vadd.f32 %v818, %v842
          %v858 = vadd.f32 %v819, %v842
          %v859 = vadd.f32 %v820, %v842
          %v860 = vadd.f32 %v821, %v842
          %v861 = vadd.f32 %v822, %v842
          %v862 = vadd.f32 %v823, %v842
          %v863 = vadd.f32 %v824, %v842
          %v864 = vadd.f32 %v825, %v842
          %v865 = vadd.f32 %v826, %v842
          %v866 = vadd.f32 %v827, %v842
          %v867 = vadd.f32 %v828, %v842
          %v868 = vadd.f32 %v829, %v842
          %v869 = vadd.f32 %v830, %v842
          %v870 = vadd.f32 %v831, %v842
          %v871 = vadd.f32 %v832, %v842
          %v872 = vadd.f32 %v833, %v842
          %v873 = vadd.f32 %v834, %v842
          %v874 = vadd.f32 %v835, %v842
          %v875 = vadd.f32 %v836, %v842
          %v876 = vmax.f32 %v844, 0.0
          %v877 = vmax.f32 %v845, 0.0
          %v878 = vmax.f32 %v846, 0.0
          %v879 = vmax.f32 %v847, 0.0
          %v880 = vmax.f32 %v848, 0.0
          %v881 = vmax.f32 %v849, 0.0
          %v882 = vmax.f32 %v850, 0.0
          %v883 = vmax.f32 %v851, 0.0
          %v884 = vmax.f32 %v852, 0.0
          %v885 = vmax.f32 %v853, 0.0
          %v886 = vmax.f32 %v854, 0.0
          %v887 = vmax.f32 %v855, 0.0
          %v888 = vmax.f32 %v856, 0.0
          %v889 = vmax.f32 %v857, 0.0
          %v890 = vmax.f32 %v858, 0.0
          %v891 = vmax.f32 %v859, 0.0
          %v892 = vmax.f32 %v860, 0.0
          %v893 = vmax.f32 %v861, 0.0
          %v894 = vmax.f32 %v862, 0.0
          %v895 = vmax.f32 %v863, 0.0
          %v896 = vmax.f32 %v864, 0.0
          %v897 = vmax.f32 %v865, 0.0
          %v898 = vmax.f32 %v866, 0.0
          %v899 = vmax.f32 %v867, 0.0
          %v900 = vmax.f32 %v868, 0.0
          %v901 = vmax.f32 %v869, 0.0
          %v902 = vmax.f32 %v870, 0.0
          %v903 = vmax.f32 %v871, 0.0
          %v904 = vmax.f32 %v872, 0.0
          %v905 = vmax.f32 %v873, 0.0
          %v906 = vmax.f32 %v874, 0.0
          %v907 = vmax.f32 %v875, 0.0
          %v908 = vpack.c.bf16 %v877, %v876
          %v909 = vpack.c.bf16 %v879, %v878
          %v910 = vpack.c.bf16 %v881, %v880
          %v911 = vpack.c.bf16 %v883, %v882
          %v912 = vpack.c.bf16 %v885, %v884
          %v913 = vpack.c.bf16 %v887, %v886
          %v914 = vpack.c.bf16 %v889, %v888
          %v915 = vpack.c.bf16 %v891, %v890
          %v916 = vpack.c.bf16 %v893, %v892
          %v917 = vpack.c.bf16 %v895, %v894
          %v918 = vpack.c.bf16 %v897, %v896
          %v919 = vpack.c.bf16 %v899, %v898
          %v920 = vpack.c.bf16 %v901, %v900
          %v921 = vpack.c.bf16 %v903, %v902
          %v922 = vpack.c.bf16 %v905, %v904
          %v923 = vpack.c.bf16 %v907, %v906
          %v940 = vunpack.c.l.b16 %v908
          %v941 = vunpack.c.h.b16 %v908
          %v942 = vunpack.c.l.b16 %v909
          %v943 = vunpack.c.h.b16 %v909
          %v944 = vunpack.c.l.b16 %v910
          %v945 = vunpack.c.h.b16 %v910
          %v946 = vunpack.c.l.b16 %v911
          %v947 = vunpack.c.h.b16 %v911
          %v948 = vunpack.c.l.b16 %v912
          %v949 = vunpack.c.h.b16 %v912
          %v950 = vunpack.c.l.b16 %v913
          %v951 = vunpack.c.h.b16 %v913
          %v952 = vunpack.c.l.b16 %v914
          %v953 = vunpack.c.h.b16 %v914
          %v954 = vunpack.c.l.b16 %v915
          %v955 = vunpack.c.h.b16 %v915
          %v956 = vunpack.c.l.b16 %v916
          %v957 = vunpack.c.h.b16 %v916
          %v958 = vunpack.c.l.b16 %v917
          %v959 = vunpack.c.h.b16 %v917
          %v960 = vunpack.c.l.b16 %v918
          %v961 = vunpack.c.h.b16 %v918
          %v962 = vunpack.c.l.b16 %v919
          %v963 = vunpack.c.h.b16 %v919
          %v964 = vunpack.c.l.b16 %v920
          %v965 = vunpack.c.h.b16 %v920
          %v966 = vunpack.c.l.b16 %v921
          %v967 = vunpack.c.h.b16 %v921
          %v968 = vunpack.c.l.b16 %v922
          %v969 = vunpack.c.h.b16 %v922
          %v970 = vunpack.c.l.b16 %v923
          %v971 = vunpack.c.h.b16 %v923
          %v972 = vpack.c.b16 %v940, %v940
          %v973 = vpack.c.b16 %v941, %v941
          %v974 = vpack.c.b16 %v942, %v942
          %v975 = vpack.c.b16 %v943, %v943
          %v976 = vpack.c.b16 %v944, %v944
          %v977 = vpack.c.b16 %v945, %v945
          %v978 = vpack.c.b16 %v946, %v946
          %v979 = vpack.c.b16 %v947, %v947
          %v980 = vpack.c.b16 %v948, %v948
          %v981 = vpack.c.b16 %v949, %v949
          %v982 = vpack.c.b16 %v950, %v950
          %v983 = vpack.c.b16 %v951, %v951
          %v984 = vpack.c.b16 %v952, %v952
          %v985 = vpack.c.b16 %v953, %v953
          %v986 = vpack.c.b16 %v954, %v954
          %v987 = vpack.c.b16 %v955, %v955
          %v988 = vpack.c.b16 %v956, %v956
          %v989 = vpack.c.b16 %v957, %v957
          %v990 = vpack.c.b16 %v958, %v958
          %v991 = vpack.c.b16 %v959, %v959
          %v992 = vpack.c.b16 %v960, %v960
          %v993 = vpack.c.b16 %v961, %v961
          %v994 = vpack.c.b16 %v962, %v962
          %v995 = vpack.c.b16 %v963, %v963
          %v996 = vpack.c.b16 %v964, %v964
          %v997 = vpack.c.b16 %v965, %v965
          %v998 = vpack.c.b16 %v966, %v966
          %v999 = vpack.c.b16 %v967, %v967
          %v1000 = vpack.c.b16 %v968, %v968
          %v1001 = vpack.c.b16 %v969, %v969
          %v1002 = vpack.c.b16 %v970, %v970
          %v1003 = vpack.c.b16 %v971, %v971
          %1036 = vst [vmem:[%s266] sm:$0xf] %v972
          %1037 = vst [vmem:[%s266 + $0x4] sm:$0xf] %v973
          %1038 = vst [vmem:[%s266 + $0x8] sm:$0xf] %v974
          %1039 = vst [vmem:[%s266 + $0xc] sm:$0xf] %v975
          %1040 = vst [vmem:[%s266 + $0x10] sm:$0xf] %v976
          %1041 = vst [vmem:[%s266 + $0x14] sm:$0xf] %v977
          %1042 = vst [vmem:[%s266 + $0x18] sm:$0xf] %v978
          %1043 = vst [vmem:[%s266 + $0x1c] sm:$0xf] %v979
          %1044 = vst [vmem:[%s266 + $0x20] sm:$0xf] %v980
          %1045 = vst [vmem:[%s266 + $0x24] sm:$0xf] %v981
          %1046 = vst [vmem:[%s266 + $0x28] sm:$0xf] %v982
          %1047 = vst [vmem:[%s266 + $0x2c] sm:$0xf] %v983
          %1048 = vst [vmem:[%s266 + $0x30] sm:$0xf] %v984
          %1049 = vst [vmem:[%s266 + $0x34] sm:$0xf] %v985
          %1050 = vst [vmem:[%s266 + $0x38] sm:$0xf] %v986
          %1051 = vst [vmem:[%s266 + $0x3c] sm:$0xf] %v987
          %1052 = vst [vmem:[%s266 + $0x40] sm:$0xf] %v988
          %1053 = vst [vmem:[%s266 + $0x44] sm:$0xf] %v989
          %1054 = vst [vmem:[%s266 + $0x48] sm:$0xf] %v990
          %1055 = vst [vmem:[%s266 + $0x4c] sm:$0xf] %v991
          %1056 = vst [vmem:[%s266 + $0x50] sm:$0xf] %v992
          %1057 = vst [vmem:[%s266 + $0x54] sm:$0xf] %v993
          %1058 = vst [vmem:[%s266 + $0x58] sm:$0xf] %v994
          %1059 = vst [vmem:[%s266 + $0x5c] sm:$0xf] %v995
          %1060 = vst [vmem:[%s266 + $0x60] sm:$0xf] %v996
          %1061 = vst [vmem:[%s266 + $0x64] sm:$0xf] %v997
          %1062 = vst [vmem:[%s266 + $0x68] sm:$0xf] %v998
          %1063 = vst [vmem:[%s266 + $0x6c] sm:$0xf] %v999
          %1064 = vst [vmem:[%s266 + $0x70] sm:$0xf] %v1000
          %1065 = vst [vmem:[%s266 + $0x74] sm:$0xf] %v1001
          %1066 = vst [vmem:[%s266 + $0x78] sm:$0xf] %v1002
          %1067 = vst [vmem:[%s266 + $0x7c] sm:$0xf] %v1003
        $region44: #{tpu_custom_call.1} parent=35 // pred_fallthru
          _
        %s1068 = sand.u32 %s155, 1
        %s1069 = scalar_lea.sflag [#allocation4], %s1068
        %s1070 = sand.u32 %s155, 1
        %s1071 = smul.addr %s1070, 128
        %s1072 = scalar_lea.vmem [#allocation3], %s1071
        // Predicated region
        $region45: #{tpu_custom_call.1} parent=35 // pred_check
          %p1073 = pneg %p165
        $region46: #{tpu_custom_call.1} parent=35 // pred_check_branch
          %1075 = sbr.rel (%p1073) target = $region48
        $region47: #{tpu_custom_call.1} parent=35 // pred_region
          %s1076 = smul.u32 32, %s23
          %s1078 = ssub.s32 2048, 2048
          %1079 = vsyncadd %s1069, %s1078
          %s1080 = sadd.s32 %s24, %s1076
          %s1081 = smul.addr %s1080, 64
          %s1082 = scalar_lea.hbm %s4, %s1081
          %s1083 = sshll.u32 %s1072, 4
          %s1084 = int_to_ptr.vmem [resolvable:$true] %s1083
          %1089 = dma.vmem_to_hbm [thread:$0]  %s1084, 2048, %s1082, %s1069, 64, 64, 4
        $region48: #{tpu_custom_call.1} parent=35 // pred_fallthru
          _
      $region36: #{tpu_custom_call.1} parent=5 // pred_fallthru
        _
      %p1090 = scmp.le.s32.totalorder 2, %s13
      // Predicated region
      $region49: #{tpu_custom_call.1} parent=5 // pred_check
        %p1091 = pneg %p1090
      $region50: #{tpu_custom_call.1} parent=5 // pred_check_branch
        %1093 = sbr.rel (%p1091) target = $region52
      $region51: #{tpu_custom_call.1} parent=5 // pred_region
        %s1094 = ssub.s32 %s13, 2
        // Predicated region
        $region53: #{tpu_custom_call.1} parent=51 // pred_check
          %p1095 = pneg %p171
        $region54: #{tpu_custom_call.1} parent=51 // pred_check_branch
          %1097 = sbr.rel (%p1095) target = $region56
        $region55: #{tpu_custom_call.1} parent=51 // pred_region
          %s1098 = sand.u32 %s156, 1
          %s1099 = scalar_lea.sflag [#allocation4], %s1098
          %s1100 = sand.u32 %s156, 1
          %s1101 = smul.addr %s1100, 128
          %s1102 = scalar_lea.vmem [#allocation3], %s1101
          %1103 = dma.done %s1099, 2048
        $region56: #{tpu_custom_call.1} parent=51 // pred_fallthru
          _
      $region52: #{tpu_custom_call.1} parent=5 // pred_fallthru
        _
    $region6: #{tpu_custom_call.1} parent=1 // loop_footer
      %s17 = sadd.s32 1, %s13
    $region7: #{tpu_custom_call.1} parent=1 // loop_footer_branch
      %12 = sbr.rel target = $region3
    $region8: #{tpu_custom_call.1} parent=1 // loop_exit
      _
    %1104 = vsyncpa [#allocation4], 1
    %s1105 = scalar_lea.sflag [#allocation4], 1
    %1106 = vsyncpa %s1105, 1

</llo_original>
